<compile_context>
chip_gen: v7x
topology: tpu7x:2x2x1
jax: 0.10.0
libtpu: 0.0.40
codegen_flags: <defaults>
</compile_context>

<pallas_src>
import math
import functools

import jax
import jax.numpy as jnp
from jax.experimental import pallas as pl
from jax.experimental.pallas import tpu as pltpu

INPUT_SIZE = 100
HIDDEN_SIZE = 50

# Lane-aligned padded sizes (gate blocks start on 128-lane boundaries).
I_PAD = 128
H_PAD = 128


def lstm_seq_kernel(x_ref, w_ref, b_ref, h0_ref, c0_ref, hseq_ref, state_ref):
    """One timestep of the LSTM cell; grid axis 0 is time ("arbitrary").

    x_ref    : [1, 1, I_PAD]          padded input row for this step
    w_ref    : [I_PAD+H_PAD, 4*H_PAD] fused (input; hidden) weights, gates
                                      stacked (i, f, g, o), resident in VMEM
    b_ref    : [1, 4*H_PAD]           combined bias (b_i* + b_h*), resident
    h0_ref   : [1, H_PAD]             initial hidden state (padded), resident
    c0_ref   : [1, H_PAD]             initial cell state (padded), resident
    hseq_ref : [1, 1, H_PAD]          per-step hidden output
    state_ref: [2, H_PAD]             resident carry: row 0 = h, row 1 = c
    """
    t = pl.program_id(0)

    @pl.when(t == 0)
    def _():
        state_ref[...] = jnp.concatenate([h0_ref[...], c0_ref[...]], axis=0)

    h = state_ref[0:1, :]                       # [1, H_PAD]
    c = state_ref[1:2, :]                       # [1, H_PAD]
    x = x_ref[0]                                # [1, I_PAD]

    # Single fused MXU matmul: [1, I_PAD+H_PAD] @ [I_PAD+H_PAD, 4*H_PAD].
    xh = jnp.concatenate([x, h], axis=-1)       # two aligned 128-lane vregs
    z = jnp.dot(xh, w_ref[...], preferred_element_type=jnp.float32) + b_ref[...]

    # Lane-aligned gate slices (each 128 wide, starting at 0/128/256/384).
    i_gate = jax.nn.sigmoid(z[:, 0 * H_PAD:1 * H_PAD])
    f_gate = jax.nn.sigmoid(z[:, 1 * H_PAD:2 * H_PAD])
    g_gate = jnp.tanh(z[:, 2 * H_PAD:3 * H_PAD])
    o_gate = jax.nn.sigmoid(z[:, 3 * H_PAD:4 * H_PAD])

    c_next = f_gate * c + i_gate * g_gate       # padded lanes stay exactly 0
    h_next = o_gate * jnp.tanh(c_next)

    # One lane-dense store for the carry/final state, one for the sequence.
    state_ref[...] = jnp.concatenate([h_next, c_next], axis=0)
    hseq_ref[...] = h_next[None]


def pack_params(params, input_size=INPUT_SIZE, hidden_size=HIDDEN_SIZE):
    """Done ONCE (outside the per-step path): build fused, padded weights.

    Returns:
      w: [I_PAD + H_PAD, 4*H_PAD]  rows 0..I-1 hold W_x^T, rows I_PAD..I_PAD+H-1
                                   hold W_h^T; gate k occupies columns
                                   [k*H_PAD, k*H_PAD + H); padding is zero.
      b: [1, 4*H_PAD]              combined bias, same gate layout, zero padded.
    """
    I, H = input_size, hidden_size
    w = jnp.zeros((I_PAD + H_PAD, 4 * H_PAD), jnp.float32)
    b = jnp.zeros((1, 4 * H_PAD), jnp.float32)
    for k, g in enumerate(("i", "f", "g", "o")):
        col = k * H_PAD
        w = w.at[0:I, col:col + H].set(params[f"w_i{g}"].astype(jnp.float32).T)
        w = w.at[I_PAD:I_PAD + H, col:col + H].set(
            params[f"w_h{g}"].astype(jnp.float32).T)
        b = b.at[0, col:col + H].set(
            (params[f"b_i{g}"] + params[f"b_h{g}"]).astype(jnp.float32)[:, 0])
    return w, b


@jax.jit
def naive_lstm_forward(inputs, state, packed_weights):
    """Forward matching NaiveLSTM.forward.

    inputs         : [1, seq, input_size]   (module uses seq == 1)
    state          : (h [1, 1, hidden], c [1, 1, hidden])
    packed_weights : (w [I_PAD+H_PAD, 4*H_PAD], b [1, 4*H_PAD]) from pack_params

    Returns (hidden_seq [seq, 1, hidden], (h_next [1, 1, hidden],
                                           c_next [1, 1, hidden]))
    """
    w, b = packed_weights
    h0, c0 = state
    T = inputs.shape[1]
    I, H = INPUT_SIZE, HIDDEN_SIZE

    # Cheap per-call zero-padding of the tiny activations (weights are
    # already packed/padded once, outside this function).
    x_seq = jnp.zeros((T, 1, I_PAD), jnp.float32).at[:, 0, :I].set(
        inputs[0].astype(jnp.float32))
    h0p = jnp.zeros((1, H_PAD), jnp.float32).at[:, :H].set(
        h0[0].astype(jnp.float32))
    c0p = jnp.zeros((1, H_PAD), jnp.float32).at[:, :H].set(
        c0[0].astype(jnp.float32))

    hseq_pad, state_pad = pl.pallas_call(
        lstm_seq_kernel,
        grid=(T,),
        in_specs=[
            pl.BlockSpec((1, 1, I_PAD), lambda t: (t, 0, 0)),          # x step t
            pl.BlockSpec((I_PAD + H_PAD, 4 * H_PAD), lambda t: (0, 0)),  # W resident
            pl.BlockSpec((1, 4 * H_PAD), lambda t: (0, 0)),             # b resident
            pl.BlockSpec((1, H_PAD), lambda t: (0, 0)),                 # h0 resident
            pl.BlockSpec((1, H_PAD), lambda t: (0, 0)),                 # c0 resident
        ],
        out_specs=(
            pl.BlockSpec((1, 1, H_PAD), lambda t: (t, 0, 0)),           # hidden seq
            pl.BlockSpec((2, H_PAD), lambda t: (0, 0)),                 # carried h,c
        ),
        out_shape=(
            jax.ShapeDtypeStruct((T, 1, H_PAD), jnp.float32),
            jax.ShapeDtypeStruct((2, H_PAD), jnp.float32),
        ),
        compiler_params=pltpu.CompilerParams(
            dimension_semantics=("arbitrary",)),
    )(x_seq, w, b, h0p, c0p)

    hidden_seq = hseq_pad[:, :, :H]              # [T, 1, H]
    h_next_t = state_pad[0:1, :H][None]          # [1, 1, H]
    c_next_t = state_pad[1:2, :H][None]          # [1, 1, H]
    return hidden_seq, (h_next_t, c_next_t)


def init_params(key, input_size, hidden_size):
    """Deterministic init matching reset_weigths(): U(-stdv, stdv)."""
    stdv = 1.0 / math.sqrt(hidden_size)
    shapes = {
        "w_ii": (hidden_size, input_size), "w_hi": (hidden_size, hidden_size),
        "b_ii": (hidden_size, 1), "b_hi": (hidden_size, 1),
        "w_if": (hidden_size, input_size), "w_hf": (hidden_size, hidden_size),
        "b_if": (hidden_size, 1), "b_hf": (hidden_size, 1),
        "w_io": (hidden_size, input_size), "w_ho": (hidden_size, hidden_size),
        "b_io": (hidden_size, 1), "b_ho": (hidden_size, 1),
        "w_ig": (hidden_size, input_size), "w_hg": (hidden_size, hidden_size),
        "b_ig": (hidden_size, 1), "b_hg": (hidden_size, 1),
    }
    params = {}
    keys = jax.random.split(key, len(shapes))
    for k, (name, shape) in zip(keys, sorted(shapes.items())):
        params[name] = jax.random.uniform(
            k, shape, dtype=jnp.float32, minval=-stdv, maxval=stdv)
    return params


def _reference_forward(inputs, state, params):
    """Pure-JAX reference mirroring the PyTorch code (column-vector math)."""
    h, c = state
    h_t = h[0].T                                  # [H, 1]
    c_t = c[0].T                                  # [H, 1]
    x = inputs[:, 0, :].T                         # [I, 1]
    p = params
    i = jax.nn.sigmoid(p["w_ii"] @ x + p["b_ii"] + p["w_hi"] @ h_t + p["b_hi"])
    f = jax.nn.sigmoid(p["w_if"] @ x + p["b_if"] + p["w_hf"] @ h_t + p["b_hf"])
    g = jnp.tanh(p["w_ig"] @ x + p["b_ig"] + p["w_hg"] @ h_t + p["b_hg"])
    o = jax.nn.sigmoid(p["w_io"] @ x + p["b_io"] + p["w_ho"] @ h_t + p["b_ho"])
    c_next = f * c_t + i * g
    h_next = o * jnp.tanh(c_next)
    return h_next.T[None], c_next.T[None]


if __name__ == "__main__":
    key = jax.random.PRNGKey(0)
    k_param, k_x, k_h, k_c = jax.random.split(key, 4)

    params = init_params(k_param, INPUT_SIZE, HIDDEN_SIZE)
    packed = pack_params(params)                 # one-time weight packing
    packed = jax.block_until_ready(packed)

    # inputs: [1, 1, input_size]; state: ([1, 1, hidden], [1, 1, hidden])
    x = jax.random.normal(k_x, (1, 1, INPUT_SIZE), dtype=jnp.float32)
    h0 = jax.random.normal(k_h, (1, 1, HIDDEN_SIZE), dtype=jnp.float32)
    c0 = jax.random.normal(k_c, (1, 1, HIDDEN_SIZE), dtype=jnp.float32)

    hidden_seq, (h_next, c_next) = naive_lstm_forward(x, (h0, c0), packed)
    jax.block_until_ready((hidden_seq, h_next, c_next))

    # Sanity check against a pure-JAX reference of the PyTorch math.
    h_ref, c_ref = _reference_forward(x, (h0, c0), params)
    assert hidden_seq.shape == (1, 1, HIDDEN_SIZE)
    assert h_next.shape == (1, 1, HIDDEN_SIZE)
    assert c_next.shape == (1, 1, HIDDEN_SIZE)
    assert jnp.allclose(h_next, h_ref, atol=1e-5, rtol=1e-5)
    assert jnp.allclose(c_next, c_ref, atol=1e-5, rtol=1e-5)
    assert jnp.allclose(hidden_seq[0], h_ref, atol=1e-5, rtol=1e-5)

    print("KERNEL_OK")
</pallas_src>

<mosaic_0001>
module attributes {stable_mosaic.version = 11 : i64} {
  func.func @lstm_seq_kernel(%arg0: i32, %arg1: memref<1x1x128xf32, #tpu.memory_space<vmem>>, %arg2: memref<256x512xf32, #tpu.memory_space<vmem>>, %arg3: memref<1x512xf32, #tpu.memory_space<vmem>>, %arg4: memref<1x128xf32, #tpu.memory_space<vmem>>, %arg5: memref<1x128xf32, #tpu.memory_space<vmem>>, %arg6: memref<1x1x128xf32, #tpu.memory_space<vmem>>, %arg7: memref<2x128xf32, #tpu.memory_space<vmem>>) attributes {dimension_semantics = [#tpu.dimension_semantics<arbitrary>], iteration_bounds = array<i64: 1>, scalar_prefetch = 0 : i64, scratch_operands = 0 : i64, tpu.core_type = #tpu.core_type<tc>, window_params = [{transform_indices = @transform_0, window_bounds = array<i64: 1, 1, 128>}, {pipeline_mode = #tpu.pipeline_mode<synchronous>, transform_indices = @transform_1, window_bounds = array<i64: 256, 512>}, {pipeline_mode = #tpu.pipeline_mode<synchronous>, transform_indices = @transform_2, window_bounds = array<i64: 1, 512>}, {pipeline_mode = #tpu.pipeline_mode<synchronous>, transform_indices = @transform_3, window_bounds = array<i64: 1, 128>}, {pipeline_mode = #tpu.pipeline_mode<synchronous>, transform_indices = @transform_4, window_bounds = array<i64: 1, 128>}, {transform_indices = @transform_5, window_bounds = array<i64: 1, 1, 128>}, {pipeline_mode = #tpu.pipeline_mode<synchronous>, transform_indices = @transform_6, window_bounds = array<i64: 2, 128>}]} {
    %c0_i32 = arith.constant 0 : i32
    %0 = arith.cmpi eq, %arg0, %c0_i32 : i32
    %1 = arith.extui %0 : i1 to i32
    %c0_i32_0 = arith.constant 0 : i32
    %2 = arith.cmpi ne, %1, %c0_i32_0 : i32
    scf.if %2 {
      %c0_18 = arith.constant 0 : index
      %c0_19 = arith.constant 0 : index
      %41 = vector.load %arg4[%c0_18, %c0_19] : memref<1x128xf32, #tpu.memory_space<vmem>>, vector<1x128xf32>
      %c0_20 = arith.constant 0 : index
      %c0_21 = arith.constant 0 : index
      %42 = vector.load %arg5[%c0_20, %c0_21] : memref<1x128xf32, #tpu.memory_space<vmem>>, vector<1x128xf32>
      %43 = tpu.concatenate %41, %42 in 0 : vector<1x128xf32>, vector<1x128xf32> -> vector<2x128xf32>
      %c0_22 = arith.constant 0 : index
      %c0_23 = arith.constant 0 : index
      %44 = vector.load %arg7[%c0_22, %c0_23] : memref<2x128xf32, #tpu.memory_space<vmem>>, vector<2x128xf32>
      tpu.vector_store %arg7[%c0_22, %c0_23], %43 {strides = array<i32>} : memref<2x128xf32, #tpu.memory_space<vmem>>, vector<2x128xf32>,
    } else {
    }
    %c0 = arith.constant 0 : index
    %c0_1 = arith.constant 0 : index
    %3 = vector.load %arg7[%c0, %c0_1] : memref<2x128xf32, #tpu.memory_space<vmem>>, vector<1x128xf32>
    %c1 = arith.constant 1 : index
    %c0_2 = arith.constant 0 : index
    %4 = vector.load %arg7[%c1, %c0_2] : memref<2x128xf32, #tpu.memory_space<vmem>>, vector<1x128xf32>
    %c0_3 = arith.constant 0 : index
    %c0_4 = arith.constant 0 : index
    %c0_5 = arith.constant 0 : index
    %5 = vector.load %arg1[%c0_3, %c0_4, %c0_5] : memref<1x1x128xf32, #tpu.memory_space<vmem>>, vector<1x1x128xf32>
    %6 = vector.shape_cast %5 : vector<1x1x128xf32> to vector<1x128xf32>
    %7 = tpu.concatenate %6, %3 in 1 : vector<1x128xf32>, vector<1x128xf32> -> vector<1x256xf32>
    %c0_6 = arith.constant 0 : index
    %c0_7 = arith.constant 0 : index
    %8 = vector.load %arg2[%c0_6, %c0_7] : memref<256x512xf32, #tpu.memory_space<vmem>>, vector<256x512xf32>
    %cst = arith.constant dense<0.000000e+00> : vector<1x512xf32>
    %9 = tpu.matmul %7, %8, %cst {dimension_numbers = #tpu.dot_dimension_numbers<[1], [0], [0], [1], [0, 0, 1, 1], [], []>} : vector<1x256xf32>, vector<256x512xf32>, vector<1x512xf32> -> vector<1x512xf32>
    %c0_8 = arith.constant 0 : index
    %c0_9 = arith.constant 0 : index
    %10 = vector.load %arg3[%c0_8, %c0_9] : memref<1x512xf32, #tpu.memory_space<vmem>>, vector<1x512xf32>
    %11 = arith.addf %9, %10 : vector<1x512xf32>
    %12 = vector.extract_strided_slice %11 {offsets = [0, 0], sizes = [1, 128], strides = [1, 1]} : vector<1x512xf32> to vector<1x128xf32>
    %13 = arith.negf %12 : vector<1x128xf32>
    %14 = math.exp %13 : vector<1x128xf32>
    %cst_10 = arith.constant 1.000000e+00 : f32
    %15 = vector.broadcast %cst_10 : f32 to vector<1x128xf32>
    %16 = arith.addf %15, %14 : vector<1x128xf32>
    %17 = arith.divf %15, %16 : vector<1x128xf32>
    %18 = vector.extract_strided_slice %11 {offsets = [0, 128], sizes = [1, 128], strides = [1, 1]} : vector<1x512xf32> to vector<1x128xf32>
    %19 = arith.negf %18 : vector<1x128xf32>
    %20 = math.exp %19 : vector<1x128xf32>
    %cst_11 = arith.constant 1.000000e+00 : f32
    %21 = vector.broadcast %cst_11 : f32 to vector<1x128xf32>
    %22 = arith.addf %21, %20 : vector<1x128xf32>
    %23 = arith.divf %21, %22 : vector<1x128xf32>
    %24 = vector.extract_strided_slice %11 {offsets = [0, 256], sizes = [1, 128], strides = [1, 1]} : vector<1x512xf32> to vector<1x128xf32>
    %25 = math.tanh %24 : vector<1x128xf32>
    %26 = vector.extract_strided_slice %11 {offsets = [0, 384], sizes = [1, 128], strides = [1, 1]} : vector<1x512xf32> to vector<1x128xf32>
    %27 = arith.negf %26 : vector<1x128xf32>
    %28 = math.exp %27 : vector<1x128xf32>
    %cst_12 = arith.constant 1.000000e+00 : f32
    %29 = vector.broadcast %cst_12 : f32 to vector<1x128xf32>
    %30 = arith.addf %29, %28 : vector<1x128xf32>
    %31 = arith.divf %29, %30 : vector<1x128xf32>
    %32 = arith.mulf %23, %4 : vector<1x128xf32>
    %33 = arith.mulf %17, %25 : vector<1x128xf32>
    %34 = arith.addf %32, %33 : vector<1x128xf32>
    %35 = math.tanh %34 : vector<1x128xf32>
    %36 = arith.mulf %31, %35 : vector<1x128xf32>
    %37 = tpu.concatenate %36, %34 in 0 : vector<1x128xf32>, vector<1x128xf32> -> vector<2x128xf32>
    %c0_13 = arith.constant 0 : index
    %c0_14 = arith.constant 0 : index
    %38 = vector.load %arg7[%c0_13, %c0_14] : memref<2x128xf32, #tpu.memory_space<vmem>>, vector<2x128xf32>
    tpu.vector_store %arg7[%c0_13, %c0_14], %37 {strides = array<i32>} : memref<2x128xf32, #tpu.memory_space<vmem>>, vector<2x128xf32>,
    %39 = vector.shape_cast %36 : vector<1x128xf32> to vector<1x1x128xf32>
    %c0_15 = arith.constant 0 : index
    %c0_16 = arith.constant 0 : index
    %c0_17 = arith.constant 0 : index
    %40 = vector.load %arg6[%c0_15, %c0_16, %c0_17] : memref<1x1x128xf32, #tpu.memory_space<vmem>>, vector<1x1x128xf32>
    tpu.vector_store %arg6[%c0_15, %c0_16, %c0_17], %39 {strides = array<i32>} : memref<1x1x128xf32, #tpu.memory_space<vmem>>, vector<1x1x128xf32>,
    return
  }
  func.func @transform_0(%arg0: i32) -> (i32, i32, i32) {
    %c0_i32 = arith.constant 0 : i32
    %c0_i32_0 = arith.constant 0 : i32
    %c0_i32_1 = arith.constant 0 : i32
    return %arg0, %c0_i32, %c0_i32_0 : i32, i32, i32
  }
  func.func @transform_1(%arg0: i32) -> (i32, i32) {
    %c0_i32 = arith.constant 0 : i32
    %c0_i32_0 = arith.constant 0 : i32
    %c0_i32_1 = arith.constant 0 : i32
    return %c0_i32, %c0_i32_0 : i32, i32
  }
  func.func @transform_2(%arg0: i32) -> (i32, i32) {
    %c0_i32 = arith.constant 0 : i32
    %c0_i32_0 = arith.constant 0 : i32
    %c0_i32_1 = arith.constant 0 : i32
    return %c0_i32, %c0_i32_0 : i32, i32
  }
  func.func @transform_3(%arg0: i32) -> (i32, i32) {
    %c0_i32 = arith.constant 0 : i32
    %c0_i32_0 = arith.constant 0 : i32
    %c0_i32_1 = arith.constant 0 : i32
    return %c0_i32, %c0_i32_0 : i32, i32
  }
  func.func @transform_4(%arg0: i32) -> (i32, i32) {
    %c0_i32 = arith.constant 0 : i32
    %c0_i32_0 = arith.constant 0 : i32
    %c0_i32_1 = arith.constant 0 : i32
    return %c0_i32, %c0_i32_0 : i32, i32
  }
  func.func @transform_5(%arg0: i32) -> (i32, i32, i32) {
    %c0_i32 = arith.constant 0 : i32
    %c0_i32_0 = arith.constant 0 : i32
    %c0_i32_1 = arith.constant 0 : i32
    return %arg0, %c0_i32, %c0_i32_0 : i32, i32, i32
  }
  func.func @transform_6(%arg0: i32) -> (i32, i32) {
    %c0_i32 = arith.constant 0 : i32
    %c0_i32_0 = arith.constant 0 : i32
    %c0_i32_1 = arith.constant 0 : i32
    return %c0_i32, %c0_i32_0 : i32, i32
  }
}

</mosaic_0001>

<llo_original>
// kernel: naive_lstm_forward.1
$region0: #{naive_lstm_forward.1}
  #allocation0 [shape = 'u32[]', space=smem, size = 0x4, offset = 0x4, fixed_abs, tag = 'smem constant byte address 0x4 - core index']
  #allocation1 [shape = 'u32[144,128]{1,0:T(1,128)}', space=vmem, size = 0x12000, scoped, tag = 'internal scratch']
  %s0 = inlined_call_operand.vmem [shape: f32[1,1,128], index: 0, kind: input, shape index: {}]
  %s1 = inlined_call_operand.hbm [shape: f32[256,512], index: 1, kind: input, shape index: {}]
  %s2 = inlined_call_operand.vmem [shape: f32[1,512], index: 2, kind: input, shape index: {}]
  %s3 = inlined_call_operand.vmem [shape: f32[1,128], index: 3, kind: input, shape index: {}]
  %s4 = inlined_call_operand.vmem [shape: f32[1,128], index: 4, kind: input, shape index: {}]
  %s5 = inlined_call_operand.hbm [shape: f32[1,1,128], index: 5, kind: output, shape index: {0}]
  %s6 = inlined_call_operand.vmem [shape: f32[2,128], index: 6, kind: output, shape index: {1}]
  %7 = xla_tuple %s5, %s6
  %s8 = sld [smem:[#allocation0]]
  $region46: #{naive_lstm_forward.1} parent=0
    _
  %s10 = ssub.s32 1, %s8
  %s11 = scalar_select 0, %s10, %s8
  $region1: #{naive_lstm_forward.1} parent=0
    #allocation2 [shape = 'u8[524288]{0}', space=vmem, size = 0x80000, scoped, tag = 'input window, operand 1, single buffered']
    #allocation3 [shape = 's32[1]{0}', space=sflag, size = 0x4, scoped, tag = 'scoped memory for naive_lstm_forward.1']
    #allocation4 [shape = 's32[1]{0}', space=sflag, size = 0x4, scoped, tag = 'scoped memory for naive_lstm_forward.1']
    #allocation5 [shape = 'u8[512]{0}', space=vmem, size = 0x400, scoped, tag = 'output window, operand 0, single buffered']
    %12 = vsyncpa [#allocation3], 0
    %13 = vsyncpa [#allocation4], 0
    // Predicated region
    $region2: #{naive_lstm_forward.1} parent=1 // pred_check
      _
    $region3: #{naive_lstm_forward.1} parent=1 // pred_check_branch
      %15 = sbr.rel (0) target = $region5
    $region4: #{naive_lstm_forward.1} parent=1 // pred_region
      _
    $region5: #{naive_lstm_forward.1} parent=1 // pred_fallthru
      _
    // Predicated region
    $region6: #{naive_lstm_forward.1} parent=1 // pred_check
      _
    $region7: #{naive_lstm_forward.1} parent=1 // pred_check_branch
      %17 = sbr.rel (0) target = $region9
    $region8: #{naive_lstm_forward.1} parent=1 // pred_region
      %s19 = ssub.s32 16384, 16384
      %20 = vsyncadd [#allocation3], %s19
      %s21 = sshll.u32 [#allocation2], 4
      %s22 = int_to_ptr.vmem [resolvable:$true] %s21
      %27 = dma.hbm_to_vmem [thread:$0]  %s1, 16384, %s22, [#allocation3], 512, 512, 32
    $region9: #{naive_lstm_forward.1} parent=1 // pred_fallthru
      _
    // Predicated region
    $region10: #{naive_lstm_forward.1} parent=1 // pred_check
      _
    $region11: #{naive_lstm_forward.1} parent=1 // pred_check_branch
      %29 = sbr.rel (0) target = $region13
    $region12: #{naive_lstm_forward.1} parent=1 // pred_region
      _
    $region13: #{naive_lstm_forward.1} parent=1 // pred_fallthru
      _
    // Predicated region
    $region14: #{naive_lstm_forward.1} parent=1 // pred_check
      _
    $region15: #{naive_lstm_forward.1} parent=1 // pred_check_branch
      %31 = sbr.rel (0) target = $region17
    $region16: #{naive_lstm_forward.1} parent=1 // pred_region
      _
    $region17: #{naive_lstm_forward.1} parent=1 // pred_fallthru
      _
    // Predicated region
    $region18: #{naive_lstm_forward.1} parent=1 // pred_check
      _
    $region19: #{naive_lstm_forward.1} parent=1 // pred_check_branch
      %33 = sbr.rel (0) target = $region21
    $region20: #{naive_lstm_forward.1} parent=1 // pred_region
      _
    $region21: #{naive_lstm_forward.1} parent=1 // pred_fallthru
      _
    // Predicated region
    $region22: #{naive_lstm_forward.1} parent=1 // pred_check
      _
    $region23: #{naive_lstm_forward.1} parent=1 // pred_check_branch
      %35 = sbr.rel (0) target = $region25
    $region24: #{naive_lstm_forward.1} parent=1 // pred_region
      %36 = dma.done [#allocation3], 16384
    $region25: #{naive_lstm_forward.1} parent=1 // pred_fallthru
      _
    %p37 = scmp.eq.s32.totalorder 0, 0
    // Predicated region
    $region26: #{naive_lstm_forward.1} parent=1 // pred_check
      %p38 = pneg %p37
    $region27: #{naive_lstm_forward.1} parent=1 // pred_check_branch
      %40 = sbr.rel (%p38) target = $region29
    $region28: #{naive_lstm_forward.1} parent=1 // pred_region
      %v41 = vld [vmem:[%s3] sm:$0x1]
      %v42 = vld [vmem:[%s4] sm:$0x1]
      %v44 = vlaneseq
      %v45 = vshrl.u32 %v44, 7
      %v46 = vsub.s32 0, %v45
      %v47 = vrot.slane %v42, %v46
      %vm49 = vcmask 1040384
      %v50 = vsel %vm49, %v41, %v47
      %51 = vst [vmem:[%s6] sm:$0x3] %v50
    $region29: #{naive_lstm_forward.1} parent=1 // pred_fallthru
      _
    %v52 = vld [vmem:[%s6] sm:$0x1]
    %v53 = vld [vmem:[%s6 + $0x1] sm:$0x1]
    %v54 = vld [vmem:[%s0] sm:$0x1]
    %v55 = vld [vmem:[#allocation2] sm:$0xff]
    %v56 = vld [vmem:[#allocation2 + $0x8] sm:$0xff]
    %v57 = vld [vmem:[#allocation2 + $0x10] sm:$0xff]
    %v58 = vld [vmem:[#allocation2 + $0x18] sm:$0xff]
    %v59 = vld [vmem:[#allocation2 + $0x20] sm:$0xff]
    %v60 = vld [vmem:[#allocation2 + $0x28] sm:$0xff]
    %v61 = vld [vmem:[#allocation2 + $0x30] sm:$0xff]
    %v62 = vld [vmem:[#allocation2 + $0x38] sm:$0xff]
    %v63 = vld [vmem:[#allocation2 + $0x40] sm:$0xff]
    %v64 = vld [vmem:[#allocation2 + $0x48] sm:$0xff]
    %v65 = vld [vmem:[#allocation2 + $0x50] sm:$0xff]
    %v66 = vld [vmem:[#allocation2 + $0x58] sm:$0xff]
    %v67 = vld [vmem:[#allocation2 + $0x60] sm:$0xff]
    %v68 = vld [vmem:[#allocation2 + $0x68] sm:$0xff]
    %v69 = vld [vmem:[#allocation2 + $0x70] sm:$0xff]
    %v70 = vld [vmem:[#allocation2 + $0x78] sm:$0xff]
    %v71 = vld [vmem:[#allocation2 + $0x80] sm:$0xff]
    %v72 = vld [vmem:[#allocation2 + $0x88] sm:$0xff]
    %v73 = vld [vmem:[#allocation2 + $0x90] sm:$0xff]
    %v74 = vld [vmem:[#allocation2 + $0x98] sm:$0xff]
    %v75 = vld [vmem:[#allocation2 + $0xa0] sm:$0xff]
    %v76 = vld [vmem:[#allocation2 + $0xa8] sm:$0xff]
    %v77 = vld [vmem:[#allocation2 + $0xb0] sm:$0xff]
    %v78 = vld [vmem:[#allocation2 + $0xb8] sm:$0xff]
    %v79 = vld [vmem:[#allocation2 + $0xc0] sm:$0xff]
    %v80 = vld [vmem:[#allocation2 + $0xc8] sm:$0xff]
    %v81 = vld [vmem:[#allocation2 + $0xd0] sm:$0xff]
    %v82 = vld [vmem:[#allocation2 + $0xd8] sm:$0xff]
    %v83 = vld [vmem:[#allocation2 + $0xe0] sm:$0xff]
    %v84 = vld [vmem:[#allocation2 + $0xe8] sm:$0xff]
    %v85 = vld [vmem:[#allocation2 + $0xf0] sm:$0xff]
    %v86 = vld [vmem:[#allocation2 + $0xf8] sm:$0xff]
    %v87 = vld [vmem:[#allocation2 + $0x100] sm:$0xff]
    %v88 = vld [vmem:[#allocation2 + $0x108] sm:$0xff]
    %v89 = vld [vmem:[#allocation2 + $0x110] sm:$0xff]
    %v90 = vld [vmem:[#allocation2 + $0x118] sm:$0xff]
    %v91 = vld [vmem:[#allocation2 + $0x120] sm:$0xff]
    %v92 = vld [vmem:[#allocation2 + $0x128] sm:$0xff]
    %v93 = vld [vmem:[#allocation2 + $0x130] sm:$0xff]
    %v94 = vld [vmem:[#allocation2 + $0x138] sm:$0xff]
    %v95 = vld [vmem:[#allocation2 + $0x140] sm:$0xff]
    %v96 = vld [vmem:[#allocation2 + $0x148] sm:$0xff]
    %v97 = vld [vmem:[#allocation2 + $0x150] sm:$0xff]
    %v98 = vld [vmem:[#allocation2 + $0x158] sm:$0xff]
    %v99 = vld [vmem:[#allocation2 + $0x160] sm:$0xff]
    %v100 = vld [vmem:[#allocation2 + $0x168] sm:$0xff]
    %v101 = vld [vmem:[#allocation2 + $0x170] sm:$0xff]
    %v102 = vld [vmem:[#allocation2 + $0x178] sm:$0xff]
    %v103 = vld [vmem:[#allocation2 + $0x180] sm:$0xff]
    %v104 = vld [vmem:[#allocation2 + $0x188] sm:$0xff]
    %v105 = vld [vmem:[#allocation2 + $0x190] sm:$0xff]
    %v106 = vld [vmem:[#allocation2 + $0x198] sm:$0xff]
    %v107 = vld [vmem:[#allocation2 + $0x1a0] sm:$0xff]
    %v108 = vld [vmem:[#allocation2 + $0x1a8] sm:$0xff]
    %v109 = vld [vmem:[#allocation2 + $0x1b0] sm:$0xff]
    %v110 = vld [vmem:[#allocation2 + $0x1b8] sm:$0xff]
    %v111 = vld [vmem:[#allocation2 + $0x1c0] sm:$0xff]
    %v112 = vld [vmem:[#allocation2 + $0x1c8] sm:$0xff]
    %v113 = vld [vmem:[#allocation2 + $0x1d0] sm:$0xff]
    %v114 = vld [vmem:[#allocation2 + $0x1d8] sm:$0xff]
    %v115 = vld [vmem:[#allocation2 + $0x1e0] sm:$0xff]
    %v116 = vld [vmem:[#allocation2 + $0x1e8] sm:$0xff]
    %v117 = vld [vmem:[#allocation2 + $0x1f0] sm:$0xff]
    %v118 = vld [vmem:[#allocation2 + $0x1f8] sm:$0xff]
    %v119 = vld [vmem:[#allocation2 + $0x200] sm:$0xff]
    %v120 = vld [vmem:[#allocation2 + $0x208] sm:$0xff]
    %v121 = vld [vmem:[#allocation2 + $0x210] sm:$0xff]
    %v122 = vld [vmem:[#allocation2 + $0x218] sm:$0xff]
    %v123 = vld [vmem:[#allocation2 + $0x220] sm:$0xff]
    %v124 = vld [vmem:[#allocation2 + $0x228] sm:$0xff]
    %v125 = vld [vmem:[#allocation2 + $0x230] sm:$0xff]
    %v126 = vld [vmem:[#allocation2 + $0x238] sm:$0xff]
    %v127 = vld [vmem:[#allocation2 + $0x240] sm:$0xff]
    %v128 = vld [vmem:[#allocation2 + $0x248] sm:$0xff]
    %v129 = vld [vmem:[#allocation2 + $0x250] sm:$0xff]
    %v130 = vld [vmem:[#allocation2 + $0x258] sm:$0xff]
    %v131 = vld [vmem:[#allocation2 + $0x260] sm:$0xff]
    %v132 = vld [vmem:[#allocation2 + $0x268] sm:$0xff]
    %v133 = vld [vmem:[#allocation2 + $0x270] sm:$0xff]
    %v134 = vld [vmem:[#allocation2 + $0x278] sm:$0xff]
    %v135 = vld [vmem:[#allocation2 + $0x280] sm:$0xff]
    %v136 = vld [vmem:[#allocation2 + $0x288] sm:$0xff]
    %v137 = vld [vmem:[#allocation2 + $0x290] sm:$0xff]
    %v138 = vld [vmem:[#allocation2 + $0x298] sm:$0xff]
    %v139 = vld [vmem:[#allocation2 + $0x2a0] sm:$0xff]
    %v140 = vld [vmem:[#allocation2 + $0x2a8] sm:$0xff]
    %v141 = vld [vmem:[#allocation2 + $0x2b0] sm:$0xff]
    %v142 = vld [vmem:[#allocation2 + $0x2b8] sm:$0xff]
    %v143 = vld [vmem:[#allocation2 + $0x2c0] sm:$0xff]
    %v144 = vld [vmem:[#allocation2 + $0x2c8] sm:$0xff]
    %v145 = vld [vmem:[#allocation2 + $0x2d0] sm:$0xff]
    %v146 = vld [vmem:[#allocation2 + $0x2d8] sm:$0xff]
    %v147 = vld [vmem:[#allocation2 + $0x2e0] sm:$0xff]
    %v148 = vld [vmem:[#allocation2 + $0x2e8] sm:$0xff]
    %v149 = vld [vmem:[#allocation2 + $0x2f0] sm:$0xff]
    %v150 = vld [vmem:[#allocation2 + $0x2f8] sm:$0xff]
    %v151 = vld [vmem:[#allocation2 + $0x300] sm:$0xff]
    %v152 = vld [vmem:[#allocation2 + $0x308] sm:$0xff]
    %v153 = vld [vmem:[#allocation2 + $0x310] sm:$0xff]
    %v154 = vld [vmem:[#allocation2 + $0x318] sm:$0xff]
    %v155 = vld [vmem:[#allocation2 + $0x320] sm:$0xff]
    %v156 = vld [vmem:[#allocation2 + $0x328] sm:$0xff]
    %v157 = vld [vmem:[#allocation2 + $0x330] sm:$0xff]
    %v158 = vld [vmem:[#allocation2 + $0x338] sm:$0xff]
    %v159 = vld [vmem:[#allocation2 + $0x340] sm:$0xff]
    %v160 = vld [vmem:[#allocation2 + $0x348] sm:$0xff]
    %v161 = vld [vmem:[#allocation2 + $0x350] sm:$0xff]
    %v162 = vld [vmem:[#allocation2 + $0x358] sm:$0xff]
    %v163 = vld [vmem:[#allocation2 + $0x360] sm:$0xff]
    %v164 = vld [vmem:[#allocation2 + $0x368] sm:$0xff]
    %v165 = vld [vmem:[#allocation2 + $0x370] sm:$0xff]
    %v166 = vld [vmem:[#allocation2 + $0x378] sm:$0xff]
    %v167 = vld [vmem:[#allocation2 + $0x380] sm:$0xff]
    %v168 = vld [vmem:[#allocation2 + $0x388] sm:$0xff]
    %v169 = vld [vmem:[#allocation2 + $0x390] sm:$0xff]
    %v170 = vld [vmem:[#allocation2 + $0x398] sm:$0xff]
    %v171 = vld [vmem:[#allocation2 + $0x3a0] sm:$0xff]
    %v172 = vld [vmem:[#allocation2 + $0x3a8] sm:$0xff]
    %v173 = vld [vmem:[#allocation2 + $0x3b0] sm:$0xff]
    %v174 = vld [vmem:[#allocation2 + $0x3b8] sm:$0xff]
    %v175 = vld [vmem:[#allocation2 + $0x3c0] sm:$0xff]
    %v176 = vld [vmem:[#allocation2 + $0x3c8] sm:$0xff]
    %v177 = vld [vmem:[#allocation2 + $0x3d0] sm:$0xff]
    %v178 = vld [vmem:[#allocation2 + $0x3d8] sm:$0xff]
    %v179 = vld [vmem:[#allocation2 + $0x3e0] sm:$0xff]
    %v180 = vld [vmem:[#allocation2 + $0x3e8] sm:$0xff]
    %v181 = vld [vmem:[#allocation2 + $0x3f0] sm:$0xff]
    %v182 = vld [vmem:[#allocation2 + $0x3f8] sm:$0xff]
    %v183 = vld [vmem:[%s2] sm:$0xf]
    %v185 = vlaneseq
    %v186 = vshrl.u32 %v185, 7
    %v187 = vsub.s32 0, %v186
    %v188 = vrot.slane %v183, %v187
    %v189 = vlaneseq
    %v190 = vshrl.u32 %v189, 7
    %v191 = vsub.s32 1, %v190
    %v192 = vrot.slane %v183, %v191
    %v193 = vlaneseq
    %v194 = vshrl.u32 %v193, 7
    %v195 = vsub.s32 2, %v194
    %v196 = vrot.slane %v183, %v195
    %v197 = vlaneseq
    %v198 = vshrl.u32 %v197, 7
    %v199 = vsub.s32 3, %v198
    %v200 = vrot.slane %v183, %v199
    %205 = vmatprep.subr.mxu0 %v56
    %206 = vmatpush1.msra.mxu0 %v55
    %207 = vmatprep.subr.mxu0 %v60
    %208 = vmatpush1.msra.mxu0 %v59
    %209 = vmatprep.subr.mxu0 %v64
    %210 = vmatpush1.msra.mxu0 %v63
    %211 = vmatprep.subr.mxu0 %v68
    %212 = vmatpush1.msra.mxu0 %v67
    %213 = vmatprep.subr.mxu0 %v72
    %214 = vmatpush1.msra.mxu0 %v71
    %215 = vmatprep.subr.mxu0 %v76
    %216 = vmatpush1.msra.mxu0 %v75
    %217 = vmatprep.subr.mxu0 %v80
    %218 = vmatpush1.msra.mxu0 %v79
    %219 = vmatprep.subr.mxu0 %v84
    %220 = vmatpush1.msra.mxu0 %v83
    %221 = vmatprep.subr.mxu0 %v88
    %222 = vmatpush1.msra.mxu0 %v87
    %223 = vmatprep.subr.mxu0 %v92
    %224 = vmatpush1.msra.mxu0 %v91
    %225 = vmatprep.subr.mxu0 %v96
    %226 = vmatpush1.msra.mxu0 %v95
    %227 = vmatprep.subr.mxu0 %v100
    %228 = vmatpush1.msra.mxu0 %v99
    %229 = vmatprep.subr.mxu0 %v104
    %230 = vmatpush1.msra.mxu0 %v103
    %231 = vmatprep.subr.mxu0 %v108
    %232 = vmatpush1.msra.mxu0 %v107
    %233 = vmatprep.subr.mxu0 %v112
    %234 = vmatpush1.msra.mxu0 %v111
    %235 = vmatprep.subr.mxu0 %v116
    %236 = vmatpush1.msra.mxu0 %v115
    %237 = vmatprep.subr.mxu0 %v120
    %238 = vmatpush1.msra.mxu0 %v119
    %239 = vmatprep.subr.mxu0 %v124
    %240 = vmatpush1.msra.mxu0 %v123
    %241 = vmatprep.subr.mxu0 %v128
    %242 = vmatpush1.msra.mxu0 %v127
    %243 = vmatprep.subr.mxu0 %v132
    %244 = vmatpush1.msra.mxu0 %v131
    %245 = vmatprep.subr.mxu0 %v136
    %246 = vmatpush1.msra.mxu0 %v135
    %247 = vmatprep.subr.mxu0 %v140
    %248 = vmatpush1.msra.mxu0 %v139
    %249 = vmatprep.subr.mxu0 %v144
    %250 = vmatpush1.msra.mxu0 %v143
    %251 = vmatprep.subr.mxu0 %v148
    %252 = vmatpush1.msra.mxu0 %v147
    %253 = vmatprep.subr.mxu0 %v152
    %254 = vmatpush1.msra.mxu0 %v151
    %255 = vmatprep.subr.mxu0 %v156
    %256 = vmatpush1.msra.mxu0 %v155
    %257 = vmatprep.subr.mxu0 %v160
    %258 = vmatpush1.msra.mxu0 %v159
    %259 = vmatprep.subr.mxu0 %v164
    %260 = vmatpush1.msra.mxu0 %v163
    %261 = vmatprep.subr.mxu0 %v168
    %262 = vmatpush1.msra.mxu0 %v167
    %263 = vmatprep.subr.mxu0 %v172
    %264 = vmatpush1.msra.mxu0 %v171
    %265 = vmatprep.subr.mxu0 %v176
    %266 = vmatpush1.msra.mxu0 %v175
    %267 = vmatprep.subr.mxu0 %v180
    %268 = vmatpush1.msra.mxu0 %v179
    %269 = vmatprep.mubr.f32.mxu0 %v52
    %270 = vmatmul.mubr.f32.gmra.mrb[0].mxu0 %v54
    %v271 = vpop.f32.mrb[0].mxu0
    %v272 = vadd.f32 %v188, %v271
    %v273 = vpop.f32.mrb[0].mxu0
    %v274 = vadd.f32 %v192, %v273
    %275 = vdwg.mxu0
    %276 = vmatprep.subr.mxu0 %v58
    %277 = vmatpush1.msra.mxu0 %v57
    %278 = vmatprep.subr.mxu0 %v62
    %279 = vmatpush1.msra.mxu0 %v61
    %280 = vmatprep.subr.mxu0 %v66
    %281 = vmatpush1.msra.mxu0 %v65
    %282 = vmatprep.subr.mxu0 %v70
    %283 = vmatpush1.msra.mxu0 %v69
    %284 = vmatprep.subr.mxu0 %v74
    %285 = vmatpush1.msra.mxu0 %v73
    %286 = vmatprep.subr.mxu0 %v78
    %287 = vmatpush1.msra.mxu0 %v77
    %288 = vmatprep.subr.mxu0 %v82
    %289 = vmatpush1.msra.mxu0 %v81
    %290 = vmatprep.subr.mxu0 %v86
    %291 = vmatpush1.msra.mxu0 %v85
    %292 = vmatprep.subr.mxu0 %v90
    %293 = vmatpush1.msra.mxu0 %v89
    %294 = vmatprep.subr.mxu0 %v94
    %295 = vmatpush1.msra.mxu0 %v93
    %296 = vmatprep.subr.mxu0 %v98
    %297 = vmatpush1.msra.mxu0 %v97
    %298 = vmatprep.subr.mxu0 %v102
    %299 = vmatpush1.msra.mxu0 %v101
    %300 = vmatprep.subr.mxu0 %v106
    %301 = vmatpush1.msra.mxu0 %v105
    %302 = vmatprep.subr.mxu0 %v110
    %303 = vmatpush1.msra.mxu0 %v109
    %304 = vmatprep.subr.mxu0 %v114
    %305 = vmatpush1.msra.mxu0 %v113
    %306 = vmatprep.subr.mxu0 %v118
    %307 = vmatpush1.msra.mxu0 %v117
    %308 = vmatprep.subr.mxu0 %v122
    %309 = vmatpush1.msra.mxu0 %v121
    %310 = vmatprep.subr.mxu0 %v126
    %311 = vmatpush1.msra.mxu0 %v125
    %312 = vmatprep.subr.mxu0 %v130
    %313 = vmatpush1.msra.mxu0 %v129
    %314 = vmatprep.subr.mxu0 %v134
    %315 = vmatpush1.msra.mxu0 %v133
    %316 = vmatprep.subr.mxu0 %v138
    %317 = vmatpush1.msra.mxu0 %v137
    %318 = vmatprep.subr.mxu0 %v142
    %319 = vmatpush1.msra.mxu0 %v141
    %320 = vmatprep.subr.mxu0 %v146
    %321 = vmatpush1.msra.mxu0 %v145
    %322 = vmatprep.subr.mxu0 %v150
    %323 = vmatpush1.msra.mxu0 %v149
    %324 = vmatprep.subr.mxu0 %v154
    %325 = vmatpush1.msra.mxu0 %v153
    %326 = vmatprep.subr.mxu0 %v158
    %327 = vmatpush1.msra.mxu0 %v157
    %328 = vmatprep.subr.mxu0 %v162
    %329 = vmatpush1.msra.mxu0 %v161
    %330 = vmatprep.subr.mxu0 %v166
    %331 = vmatpush1.msra.mxu0 %v165
    %332 = vmatprep.subr.mxu0 %v170
    %333 = vmatpush1.msra.mxu0 %v169
    %334 = vmatprep.subr.mxu0 %v174
    %335 = vmatpush1.msra.mxu0 %v173
    %336 = vmatprep.subr.mxu0 %v178
    %337 = vmatpush1.msra.mxu0 %v177
    %338 = vmatprep.subr.mxu0 %v182
    %339 = vmatpush1.msra.mxu0 %v181
    %340 = vmatprep.mubr.f32.mxu0 %v52
    %341 = vmatmul.mubr.f32.gmra.mrb[0].mxu0 %v54
    %v342 = vpop.f32.mrb[0].mxu0
    %v343 = vadd.f32 %v196, %v342
    %v344 = vpop.f32.mrb[0].mxu0
    %v345 = vadd.f32 %v200, %v344
    %346 = vdwg.mxu0
    %v347 = vxor.u32 %v272, 2147483648
    %v348 = vmul.f32 %v347, 1.442695
    %v349 = vpow.pop %v348
    %v350 = vadd.f32 %v349, 1.0
    %v351 = vrcp.pop %v350
    %v352 = vmul.f32 1.0, %v351
    %v353 = vxor.u32 %v274, 2147483648
    %v354 = vmul.f32 %v353, 1.442695
    %v355 = vpow.pop %v354
    %v356 = vadd.f32 %v355, 1.0
    %v357 = vrcp.pop %v356
    %v358 = vmul.f32 1.0, %v357
    %v359 = vtanh.pop %v343
    %v360 = vxor.u32 %v345, 2147483648
    %v361 = vmul.f32 %v360, 1.442695
    %v362 = vpow.pop %v361
    %v363 = vadd.f32 %v362, 1.0
    %v364 = vrcp.pop %v363
    %v365 = vmul.f32 1.0, %v364
    %v366 = vmul.f32 %v358, %v53
    %v367 = vmul.f32 %v352, %v359
    %v368 = vadd.f32 %v366, %v367
    %v369 = vtanh.pop %v368
    %v370 = vmul.f32 %v365, %v369
    %v372 = vrot.slane %v368, 7
    %vm374 = vcmask 1040384
    %v375 = vsel %vm374, %v370, %v372
    %376 = vst [vmem:[%s6] sm:$0x3] %v375
    %377 = vst [vmem:[#allocation5] sm:$0x1] %v370
    // Predicated region
    $region30: #{naive_lstm_forward.1} parent=1 // pred_check
      _
    $region31: #{naive_lstm_forward.1} parent=1 // pred_check_branch
      %379 = sbr.rel (0) target = $region33
    $region32: #{naive_lstm_forward.1} parent=1 // pred_region
      %s381 = ssub.s32 16, 16
      %382 = vsyncadd [#allocation4], %s381
      %s384 = sshll.u32 [#allocation5], 4
      %s385 = int_to_ptr.vmem [resolvable:$true] %s384
      %387 = dma.vmem_to_hbm [thread:$0]  %s385, 16, %s5, [#allocation4]
    $region33: #{naive_lstm_forward.1} parent=1 // pred_fallthru
      _
    // Predicated region
    $region34: #{naive_lstm_forward.1} parent=1 // pred_check
      _
    $region35: #{naive_lstm_forward.1} parent=1 // pred_check_branch
      %389 = sbr.rel (0) target = $region37
    $region36: #{naive_lstm_forward.1} parent=1 // pred_region
      _
    $region37: #{naive_lstm_forward.1} parent=1 // pred_fallthru
      _
    // Predicated region
    $region38: #{naive_lstm_forward.1} parent=1 // pred_check
      _
    $region39: #{naive_lstm_forward.1} parent=1 // pred_check_branch
      %391 = sbr.rel (0) target = $region41
    $region40: #{naive_lstm_forward.1} parent=1 // pred_region
      %392 = dma.done [#allocation4], 16
    $region41: #{naive_lstm_forward.1} parent=1 // pred_fallthru
      _
    // Predicated region
    $region42: #{naive_lstm_forward.1} parent=1 // pred_check
      _
    $region43: #{naive_lstm_forward.1} parent=1 // pred_check_branch
      %394 = sbr.rel (0) target = $region45
    $region44: #{naive_lstm_forward.1} parent=1 // pred_region
      _
    $region45: #{naive_lstm_forward.1} parent=1 // pred_fallthru
      _
    %395 = vsyncpa [#allocation3], 1
    %396 = vsyncpa [#allocation4], 1

</llo_original>
